<compile_context>
chip_gen: v6e
topology: v6e:2x2x1
jax: 0.10.0
libtpu: 0.0.40
codegen_flags: <defaults>
</compile_context>

<pallas_src>
import math

import numpy as np

import jax
import jax.numpy as jnp
from jax.experimental import pallas as pl
from jax.experimental.pallas import tpu as pltpu


def _round_up(x, m):
    return ((x + m - 1) // m) * m


def _cdiv(a, b):
    return (a + b - 1) // b


def _device_policy():
    """(use_bf16_tanh, num_tensorcores) derived from the TPU generation.

    v6e/v7x have a bf16 EUP path (~2x tanh throughput); v5e does not.
    v7x has 2 TensorCores per chip -> keep the grid a multiple of 2 so the
    'parallel' grid axis shards evenly across them.
    """
    kind = ""
    try:
        kind = jax.devices()[0].device_kind.lower()
    except Exception:
        pass
    use_bf16_tanh = ("v6" in kind) or ("v7" in kind)
    num_cores = 2 if "v7" in kind else 1
    return use_bf16_tanh, num_cores


def _choose_tile_and_grid(n, target, num_cores):
    """Grid-first lane tiling.

    Caps pad waste at < 128 points per grid step (tile-first could pad up to
    ~50%, and dead lanes still pay full EUP tanh cost), uses one big tile on
    single-TC chips, and rounds the grid up to a multiple of `num_cores`
    (v7x) so both TensorCores get equal-sized work.
    """
    target = max(128, (target // 128) * 128)
    n128 = _round_up(max(n, 1), 128)
    grid = max(1, _cdiv(n128, target))
    if num_cores > 1:
        grid = _round_up(grid, num_cores)
    tn = _round_up(_cdiv(n, grid), 128)
    n_pad = tn * grid
    return tn, grid, n_pad


# Per-layer compute modes.
_MODE_VPU_MAD = "vpu_mad"      # tiny contraction dim: broadcast MADs on the VPU
_MODE_XLU_REDUCE = "xlu_red"   # out_dim == 1 final layer: sublane reduction (XLU)
_MODE_MXU = "mxu"              # regular MXU matmul


def _plan_layers(weights):
    """Compute mode + slab row offset for every Linear layer (all static)."""
    num_linear = len(weights)
    plan = []
    row = 0
    max_col = 0
    for li, w in enumerate(weights):
        out_i, in_i = w.shape
        last = li == num_linear - 1
        if li == 0 and in_i <= 4:
            mode, nrows, ncols = _MODE_VPU_MAD, out_i, in_i + 1
        elif last and out_i == 1:
            mode, nrows, ncols = _MODE_XLU_REDUCE, in_i, 2
        else:
            mode, nrows, ncols = _MODE_MXU, out_i, in_i + 1
        plan.append((mode, row, out_i, in_i))
        row += _round_up(nrows, 8)          # keep every param 8-sublane aligned
        max_col = max(max_col, ncols)
    total_rows = _round_up(row, 8)
    total_cols = _round_up(max_col, 128)
    return plan, total_rows, total_cols


def _pack_params(weights, biases, plan, total_rows, total_cols):
    """Pack ALL weights + biases into one (rows, cols) f32 slab.

    One slab -> one DMA descriptor and one double-buffered VMEM slot instead
    of 2*L tiny ones (a measurable fixed-cost cut for this overhead-dominated
    kernel).  Layout per layer (rows 8-aligned):
      * vpu_mad / mxu : W at cols [0:in), bias at col `in`.
      * xlu_reduce    : W^T (in, 1) at col 0, bias scalar at (off, 1) —
                        stored transposed so the kernel needs no reshape.
    """
    slab = np.zeros((total_rows, total_cols), np.float32)
    for (mode, off, out_i, in_i), w, b in zip(plan, weights, biases):
        w = np.asarray(w, np.float32)
        b = np.asarray(b, np.float32)
        if mode == _MODE_XLU_REDUCE:
            slab[off:off + in_i, 0] = w[0, :]
            slab[off, 1] = b[0]
        else:
            slab[off:off + out_i, 0:in_i] = w
            slab[off:off + out_i, in_i] = b
    return jnp.asarray(slab)


def _make_pinn_kernel(plan, use_bf16_tanh):
    num_linear = len(plan)

    def kernel(x_ref, p_ref, o_ref):
        h = x_ref[...].astype(jnp.float32)                    # (in0, tn)
        tn = h.shape[1]
        for li, (mode, off, out_i, in_i) in enumerate(plan):
            if mode == _MODE_VPU_MAD:
                # Tiny contraction dim (K = in_dim <= 4): broadcast MADs on
                # the VPU instead of an almost-empty MXU matmul.
                w = p_ref[off:off + out_i, 0:in_i]            # (out_i, in_i)
                b = p_ref[off:off + out_i, in_i:in_i + 1]     # (out_i, 1)
                acc = jnp.broadcast_to(b, (out_i, tn))
                for k in range(in_i):
                    acc = acc + w[:, k:k + 1] * h[k:k + 1, :]
                h = acc
            elif mode == _MODE_XLU_REDUCE:
                # Final (1, K) @ (K, tn) layer: elementwise mul + sublane
                # reduction on the otherwise-idle XLU; avoids an M=1 MXU pass
                # and its result-FIFO drain in the epilogue.
                wt = p_ref[off:off + in_i, 0:1]               # (in_i, 1) = W^T
                b = p_ref[off:off + 1, 1:2]                   # (1, 1)
                h = jnp.sum(wt * h, axis=0, keepdims=True) + b
            else:
                # Hidden 32x32 layers stay on the MXU: they are free filler in
                # the MXU slot while the EUP (tanh) is the binding unit.
                w = p_ref[off:off + out_i, 0:in_i]
                b = p_ref[off:off + out_i, in_i:in_i + 1]
                h = jnp.dot(w, h, preferred_element_type=jnp.float32) + b
            if li < num_linear - 1:
                if use_bf16_tanh:
                    # v6e/v7x: bf16 EUP path (~2x tanh throughput) — the
                    # kernel is EUP-bound, so this is the main compute win.
                    h = jnp.tanh(h.astype(jnp.bfloat16)).astype(jnp.float32)
                else:
                    # v5e has no bf16 EUP; also used for exact-parity builds.
                    h = jnp.tanh(h)
        o_ref[...] = h.astype(o_ref.dtype)

    return kernel


def pinn_forward(xt, weights, biases, *, tile_n=8192, use_bf16_tanh=None):
    """Fused PINN MLP forward.

    xt:      (N, in_dim) float32
    weights: list of (out_i, in_i) float32  (PyTorch nn.Linear layout)
    biases:  list of (out_i,)      float32
    returns: (N, out_dim) float32
    """
    n, in_dim = xt.shape
    num_linear = len(weights)
    assert len(biases) == num_linear
    out_dim = weights[-1].shape[0]

    auto_bf16, num_cores = _device_policy()
    if use_bf16_tanh is None:
        use_bf16_tanh = auto_bf16

    tn, grid, n_pad = _choose_tile_and_grid(n, tile_n, num_cores)

    # Feature-major activations: batch on the 128-wide lane axis, features on
    # sublanes; zero-pad the batch tail to tn * grid.
    xt_t = jnp.pad(xt.T.astype(jnp.float32), ((0, 0), (0, n_pad - n)))

    plan, total_rows, total_cols = _plan_layers(weights)
    slab = _pack_params(weights, biases, plan, total_rows, total_cols)

    kernel = _make_pinn_kernel(plan, use_bf16_tanh)

    in_specs = [
        pl.BlockSpec((in_dim, tn), lambda i: (0, i)),               # x tile
        pl.BlockSpec((total_rows, total_cols), lambda i: (0, 0)),   # param slab
    ]
    out_spec = pl.BlockSpec((out_dim, tn), lambda i: (0, i))        # lane-dense

    flops = 2 * n_pad * sum(w.shape[0] * w.shape[1] for w in weights)
    transc = n_pad * sum(w.shape[0] for w in weights[:-1])
    bytes_acc = 4 * (in_dim * n_pad + out_dim * n_pad + int(slab.size))

    out_t = pl.pallas_call(
        kernel,
        out_shape=jax.ShapeDtypeStruct((out_dim, n_pad), jnp.float32),
        grid_spec=pltpu.PrefetchScalarGridSpec(
            num_scalar_prefetch=0,
            grid=(grid,),
            in_specs=in_specs,
            out_specs=out_spec,
        ),
        compiler_params=pltpu.CompilerParams(
            dimension_semantics=("parallel",),
        ),
        cost_estimate=pl.CostEstimate(
            flops=int(flops),
            transcendentals=int(transc),
            bytes_accessed=int(bytes_acc),
        ),
    )(xt_t, slab)

    # Back to PyTorch's (N, out_dim) shape; drop the padded tail.
    return out_t[:, :n].T


def init_pinn_params(layers, key):
    """PyTorch nn.Linear-style init: U(-k, k), k = 1/sqrt(fan_in).
    Weights in torch-native (out, in) layout, biases as (out,)."""
    weights, biases = [], []
    for i in range(len(layers) - 1):
        fan_in, fan_out = layers[i], layers[i + 1]
        k = 1.0 / math.sqrt(fan_in)
        key, kw, kb = jax.random.split(key, 3)
        w = jax.random.uniform(kw, (fan_out, fan_in), jnp.float32, -k, k)
        b = jax.random.uniform(kb, (fan_out,), jnp.float32, -k, k)
        weights.append(w)
        biases.append(b)
    return weights, biases


def pinn_reference(xt, weights, biases):
    """Pure-JAX reference matching torch's Sequential(Linear, Tanh, ...)."""
    h = xt
    for i, (w, b) in enumerate(zip(weights, biases)):
        h = h @ w.T + b
        if i < len(weights) - 1:
            h = jnp.tanh(h)
    return h


if __name__ == "__main__":
    # Burgers-style PINN: input (x, t) -> scalar u; small hidden widths.
    layers = [2, 32, 32, 32, 1]
    n_points = 300  # deliberately NOT a multiple of 128 to exercise the tail

    key = jax.random.PRNGKey(0)
    key, kx = jax.random.split(key)
    xt = jax.random.normal(kx, (n_points, layers[0]), jnp.float32)

    weights, biases = init_pinn_params(layers, key)
    ref = pinn_reference(xt, weights, biases)

    # 1) Exact-parity path (f32 tanh everywhere) — matches the PyTorch module.
    out_f32 = pinn_forward(xt, weights, biases, use_bf16_tanh=False)
    out_f32 = jax.block_until_ready(out_f32)
    assert out_f32.shape == (n_points, layers[-1])
    assert jnp.allclose(out_f32, ref, atol=1e-5, rtol=1e-5), "f32 mismatch"

    # 2) Device-default path (bf16 tanh on v6e/v7x, f32 on v5e); bf16 tanh
    #    needs a relaxed tolerance vs. the f32 reference.
    out = jax.block_until_ready(pinn_forward(xt, weights, biases))
    assert out.shape == (n_points, layers[-1])
    assert jnp.allclose(out, ref, atol=3e-2, rtol=3e-2), "device-path mismatch"

    print("KERNEL_OK")
</pallas_src>

<mosaic_0001>
module attributes {stable_mosaic.version = 11 : i64} {
  func.func @kernel(%arg0: i32, %arg1: memref<2x384xf32, #tpu.memory_space<vmem>>, %arg2: memref<128x128xf32, #tpu.memory_space<vmem>>, %arg3: memref<1x384xf32, #tpu.memory_space<vmem>>) attributes {dimension_semantics = [#tpu.dimension_semantics<parallel>], iteration_bounds = array<i64: 1>, scalar_prefetch = 0 : i64, scratch_operands = 0 : i64, tpu.core_type = #tpu.core_type<tc>, window_params = [{transform_indices = @transform_0, window_bounds = array<i64: 2, 384>}, {pipeline_mode = #tpu.pipeline_mode<synchronous>, transform_indices = @transform_1, window_bounds = array<i64: 128, 128>}, {transform_indices = @transform_2, window_bounds = array<i64: 1, 384>}]} {
    %c0 = arith.constant 0 : index
    %c0_0 = arith.constant 0 : index
    %0 = vector.load %arg1[%c0, %c0_0] : memref<2x384xf32, #tpu.memory_space<vmem>>, vector<2x384xf32>
    %c0_1 = arith.constant 0 : index
    %c0_2 = arith.constant 0 : index
    %1 = vector.load %arg2[%c0_1, %c0_2] : memref<128x128xf32, #tpu.memory_space<vmem>>, vector<32x2xf32>
    %c0_3 = arith.constant 0 : index
    %c2 = arith.constant 2 : index
    %2 = vector.load %arg2[%c0_3, %c2] : memref<128x128xf32, #tpu.memory_space<vmem>>, vector<32x1xf32>
    %3 = vector.shape_cast %2 : vector<32x1xf32> to vector<32x1xf32>
    %4 = vector.broadcast %3 : vector<32x1xf32> to vector<32x384xf32>
    %5 = vector.extract_strided_slice %1 {offsets = [0, 0], sizes = [32, 1], strides = [1, 1]} : vector<32x2xf32> to vector<32x1xf32>
    %6 = vector.extract_strided_slice %0 {offsets = [0, 0], sizes = [1, 384], strides = [1, 1]} : vector<2x384xf32> to vector<1x384xf32>
    %7 = vector.broadcast %5 : vector<32x1xf32> to vector<32x384xf32>
    %8 = vector.broadcast %6 : vector<1x384xf32> to vector<32x384xf32>
    %9 = arith.mulf %7, %8 : vector<32x384xf32>
    %10 = arith.addf %4, %9 : vector<32x384xf32>
    %11 = vector.extract_strided_slice %1 {offsets = [0, 1], sizes = [32, 1], strides = [1, 1]} : vector<32x2xf32> to vector<32x1xf32>
    %12 = vector.extract_strided_slice %0 {offsets = [1, 0], sizes = [1, 384], strides = [1, 1]} : vector<2x384xf32> to vector<1x384xf32>
    %13 = vector.broadcast %11 : vector<32x1xf32> to vector<32x384xf32>
    %14 = vector.broadcast %12 : vector<1x384xf32> to vector<32x384xf32>
    %15 = arith.mulf %13, %14 : vector<32x384xf32>
    %16 = arith.addf %10, %15 : vector<32x384xf32>
    %17 = math.tanh %16 : vector<32x384xf32>
    %c32 = arith.constant 32 : index
    %c0_4 = arith.constant 0 : index
    %18 = vector.load %arg2[%c32, %c0_4] : memref<128x128xf32, #tpu.memory_space<vmem>>, vector<32x32xf32>
    %c32_5 = arith.constant 32 : index
    %c32_6 = arith.constant 32 : index
    %19 = vector.load %arg2[%c32_5, %c32_6] : memref<128x128xf32, #tpu.memory_space<vmem>>, vector<32x1xf32>
    %cst = arith.constant dense<0.000000e+00> : vector<32x384xf32>
    %20 = tpu.matmul %18, %17, %cst {dimension_numbers = #tpu.dot_dimension_numbers<[1], [0], [0], [1], [0, 0, 1, 1], [], []>} : vector<32x32xf32>, vector<32x384xf32>, vector<32x384xf32> -> vector<32x384xf32>
    %21 = vector.broadcast %19 : vector<32x1xf32> to vector<32x384xf32>
    %22 = arith.addf %20, %21 : vector<32x384xf32>
    %23 = math.tanh %22 : vector<32x384xf32>
    %c64 = arith.constant 64 : index
    %c0_7 = arith.constant 0 : index
    %24 = vector.load %arg2[%c64, %c0_7] : memref<128x128xf32, #tpu.memory_space<vmem>>, vector<32x32xf32>
    %c64_8 = arith.constant 64 : index
    %c32_9 = arith.constant 32 : index
    %25 = vector.load %arg2[%c64_8, %c32_9] : memref<128x128xf32, #tpu.memory_space<vmem>>, vector<32x1xf32>
    %cst_10 = arith.constant dense<0.000000e+00> : vector<32x384xf32>
    %26 = tpu.matmul %24, %23, %cst_10 {dimension_numbers = #tpu.dot_dimension_numbers<[1], [0], [0], [1], [0, 0, 1, 1], [], []>} : vector<32x32xf32>, vector<32x384xf32>, vector<32x384xf32> -> vector<32x384xf32>
    %27 = vector.broadcast %25 : vector<32x1xf32> to vector<32x384xf32>
    %28 = arith.addf %26, %27 : vector<32x384xf32>
    %29 = math.tanh %28 : vector<32x384xf32>
    %c96 = arith.constant 96 : index
    %c0_11 = arith.constant 0 : index
    %30 = vector.load %arg2[%c96, %c0_11] : memref<128x128xf32, #tpu.memory_space<vmem>>, vector<32x1xf32>
    %c96_12 = arith.constant 96 : index
    %c1 = arith.constant 1 : index
    %31 = vector.load %arg2[%c96_12, %c1] : memref<128x128xf32, #tpu.memory_space<vmem>>, vector<1x1xf32>
    %32 = vector.broadcast %30 : vector<32x1xf32> to vector<32x384xf32>
    %33 = arith.mulf %32, %29 : vector<32x384xf32>
    %cst_13 = arith.constant dense<0.000000e+00> : vector<384xf32>
    %34 = vector.multi_reduction <add>, %33, %cst_13 [0] : vector<32x384xf32> to vector<384xf32>
    %35 = vector.shape_cast %34 : vector<384xf32> to vector<1x384xf32>
    %36 = vector.broadcast %31 : vector<1x1xf32> to vector<1x384xf32>
    %37 = arith.addf %35, %36 : vector<1x384xf32>
    %c0_14 = arith.constant 0 : index
    %c0_15 = arith.constant 0 : index
    %38 = vector.load %arg3[%c0_14, %c0_15] : memref<1x384xf32, #tpu.memory_space<vmem>>, vector<1x384xf32>
    tpu.vector_store %arg3[%c0_14, %c0_15], %37 {strides = array<i32>} : memref<1x384xf32, #tpu.memory_space<vmem>>, vector<1x384xf32>,
    return
  }
  func.func @transform_0(%arg0: i32) -> (i32, i32) {
    %c0_i32 = arith.constant 0 : i32
    %c0_i32_0 = arith.constant 0 : i32
    return %c0_i32, %arg0 : i32, i32
  }
  func.func @transform_1(%arg0: i32) -> (i32, i32) {
    %c0_i32 = arith.constant 0 : i32
    %c0_i32_0 = arith.constant 0 : i32
    %c0_i32_1 = arith.constant 0 : i32
    return %c0_i32, %c0_i32_0 : i32, i32
  }
  func.func @transform_2(%arg0: i32) -> (i32, i32) {
    %c0_i32 = arith.constant 0 : i32
    %c0_i32_0 = arith.constant 0 : i32
    return %c0_i32, %arg0 : i32, i32
  }
}

</mosaic_0001>

<llo_original>
// kernel: tpu_custom_call.1
$region0: #{tpu_custom_call.1}
  #allocation0 [shape = 'u32[]', space=smem, size = 0x4, offset = 0x4, fixed_abs, tag = 'smem constant byte address 0x4 - core index']
  #allocation1 [shape = 'u32[144,128]{1,0:T(1,128)}', space=vmem, size = 0x12000, scoped, tag = 'internal scratch']
  %s0 = inlined_call_operand.hbm [shape: f32[2,384], index: 0, kind: input, shape index: {}]
  %s1 = inlined_call_operand.hbm [shape: f32[128,128], index: 1, kind: input, shape index: {}]
  %s2 = inlined_call_operand.hbm [shape: f32[1,384], index: 2, kind: output, shape index: {}]
  %s3 = sld [smem:[#allocation0]]
  $region26: #{tpu_custom_call.1} parent=0
    _
  %s5 = ssub.s32 1, %s3
  %s6 = scalar_select 0, %s5, %s3
  $region1: #{tpu_custom_call.1} parent=0
    #allocation2 [shape = 'u8[3072]{0}', space=vmem, size = 0xc00, scoped, tag = 'input window, operand 0, single buffered']
    #allocation3 [shape = 's32[1]{0}', space=sflag, size = 0x4, scoped, tag = 'scoped memory for tpu_custom_call.1']
    #allocation4 [shape = 's32[1]{0}', space=sflag, size = 0x4, scoped, tag = 'scoped memory for tpu_custom_call.1']
    #allocation5 [shape = 'u8[65536]{0}', space=vmem, size = 0x10000, scoped, tag = 'input window, operand 1, single buffered']
    #allocation6 [shape = 's32[1]{0}', space=sflag, size = 0x4, scoped, tag = 'scoped memory for tpu_custom_call.1']
    #allocation7 [shape = 'u8[1536]{0}', space=vmem, size = 0x800, scoped, tag = 'output window, operand 0, single buffered']
    %7 = vsyncpa [#allocation3], 0
    %8 = vsyncpa [#allocation6], 0
    %9 = vsyncpa [#allocation4], 0
    // Predicated region
    $region2: #{tpu_custom_call.1} parent=1 // pred_check
      _
    $region3: #{tpu_custom_call.1} parent=1 // pred_check_branch
      %11 = sbr.rel (0) target = $region5
    $region4: #{tpu_custom_call.1} parent=1 // pred_region
      %s13 = ssub.s32 96, 96
      %14 = vsyncadd [#allocation3], %s13
      %s16 = sshll.u32 [#allocation2], 4
      %s17 = int_to_ptr.vmem [resolvable:$true] %s16
      %19 = dma.hbm_to_vmem [thread:$0]  %s0, 96, %s17, [#allocation3]
    $region5: #{tpu_custom_call.1} parent=1 // pred_fallthru
      _
    // Predicated region
    $region6: #{tpu_custom_call.1} parent=1 // pred_check
      _
    $region7: #{tpu_custom_call.1} parent=1 // pred_check_branch
      %21 = sbr.rel (0) target = $region9
    $region8: #{tpu_custom_call.1} parent=1 // pred_region
      %s23 = ssub.s32 2048, 2048
      %24 = vsyncadd [#allocation6], %s23
      %s25 = sshll.u32 [#allocation5], 4
      %s26 = int_to_ptr.vmem [resolvable:$true] %s25
      %31 = dma.hbm_to_vmem [thread:$0]  %s1, 2048, %s26, [#allocation6], 128, 128, 8
    $region9: #{tpu_custom_call.1} parent=1 // pred_fallthru
      _
    // Predicated region
    $region10: #{tpu_custom_call.1} parent=1 // pred_check
      _
    $region11: #{tpu_custom_call.1} parent=1 // pred_check_branch
      %33 = sbr.rel (0) target = $region13
    $region12: #{tpu_custom_call.1} parent=1 // pred_region
      %34 = dma.done [#allocation3], 96
    $region13: #{tpu_custom_call.1} parent=1 // pred_fallthru
      _
    // Predicated region
    $region14: #{tpu_custom_call.1} parent=1 // pred_check
      _
    $region15: #{tpu_custom_call.1} parent=1 // pred_check_branch
      %36 = sbr.rel (0) target = $region17
    $region16: #{tpu_custom_call.1} parent=1 // pred_region
      %37 = dma.done [#allocation6], 2048
    $region17: #{tpu_custom_call.1} parent=1 // pred_fallthru
      _
    %v38 = vld [vmem:[#allocation2] sm:$0x3f]
    %v39 = vld [vmem:[#allocation5] sm:$0xff]
    %v40 = vld [vmem:[#allocation5 + $0x8] sm:$0xff]
    %v41 = vld [vmem:[#allocation5 + $0x10] sm:$0xff]
    %v42 = vld [vmem:[#allocation5 + $0x18] sm:$0xff]
    %44 = vset.pattern.permute.xlu0 2
    %45 = vperm.xlu0 %44, %v39
    %v46 = vpop.permute.xlu0 %45
    %49 = vset.pattern.permute.xlu0 2
    %50 = vperm.xlu0 %49, %v40
    %v51 = vpop.permute.xlu0 %50
    %54 = vset.pattern.permute.xlu0 2
    %55 = vperm.xlu0 %54, %v41
    %v56 = vpop.permute.xlu0 %55
    %59 = vset.pattern.permute.xlu0 2
    %60 = vperm.xlu0 %59, %v42
    %v61 = vpop.permute.xlu0 %60
    %63 = vset.pattern.permute.xlu0 0
    %64 = vperm.xlu0 %63, %v39
    %v65 = vpop.permute.xlu0 %64
    %67 = vset.pattern.permute.xlu0 0
    %68 = vperm.xlu0 %67, %v40
    %v69 = vpop.permute.xlu0 %68
    %71 = vset.pattern.permute.xlu0 0
    %72 = vperm.xlu0 %71, %v41
    %v73 = vpop.permute.xlu0 %72
    %75 = vset.pattern.permute.xlu0 0
    %76 = vperm.xlu0 %75, %v42
    %v77 = vpop.permute.xlu0 %76
    %v80 = vlaneseq
    %v81 = vshrl.u32 %v80, 7
    %v82 = vsub.s32 0, %v81
    %v83 = vrot.slane %v38, %v82
    %v84 = vlaneseq
    %v85 = vshrl.u32 %v84, 7
    %v86 = vsub.s32 2, %v85
    %v87 = vrot.slane %v38, %v86
    %v88 = vlaneseq
    %v89 = vshrl.u32 %v88, 7
    %v90 = vsub.s32 4, %v89
    %v91 = vrot.slane %v38, %v90
    %v95 = vlaneseq
    %v96 = vshrl.u32 %v95, 7
    %v97 = vsub.s32 0, %v96
    %v98 = vrot.slane %v83, %v97
    %v99 = vlaneseq
    %v100 = vshrl.u32 %v99, 7
    %v101 = vsub.s32 0, %v100
    %v102 = vrot.slane %v87, %v101
    %v103 = vlaneseq
    %v104 = vshrl.u32 %v103, 7
    %v105 = vsub.s32 0, %v104
    %v106 = vrot.slane %v91, %v105
    %v107 = vmul.f32 %v65, %v98
    %v108 = vmul.f32 %v65, %v102
    %v109 = vmul.f32 %v65, %v106
    %v110 = vmul.f32 %v69, %v98
    %v111 = vmul.f32 %v69, %v102
    %v112 = vmul.f32 %v69, %v106
    %v113 = vmul.f32 %v73, %v98
    %v114 = vmul.f32 %v73, %v102
    %v115 = vmul.f32 %v73, %v106
    %v116 = vmul.f32 %v77, %v98
    %v117 = vmul.f32 %v77, %v102
    %v118 = vmul.f32 %v77, %v106
    %v119 = vadd.f32 %v46, %v107
    %v120 = vadd.f32 %v46, %v108
    %v121 = vadd.f32 %v46, %v109
    %v122 = vadd.f32 %v51, %v110
    %v123 = vadd.f32 %v51, %v111
    %v124 = vadd.f32 %v51, %v112
    %v125 = vadd.f32 %v56, %v113
    %v126 = vadd.f32 %v56, %v114
    %v127 = vadd.f32 %v56, %v115
    %v128 = vadd.f32 %v61, %v116
    %v129 = vadd.f32 %v61, %v117
    %v130 = vadd.f32 %v61, %v118
    %131 = vset.pattern.permute.xlu0 1
    %132 = vperm.xlu0 %131, %v39
    %v133 = vpop.permute.xlu0 %132
    %135 = vset.pattern.permute.xlu0 1
    %136 = vperm.xlu0 %135, %v40
    %v137 = vpop.permute.xlu0 %136
    %139 = vset.pattern.permute.xlu0 1
    %140 = vperm.xlu0 %139, %v41
    %v141 = vpop.permute.xlu0 %140
    %143 = vset.pattern.permute.xlu0 1
    %144 = vperm.xlu0 %143, %v42
    %v145 = vpop.permute.xlu0 %144
    %v147 = vlaneseq
    %v148 = vshrl.u32 %v147, 7
    %v149 = vsub.s32 1, %v148
    %v150 = vrot.slane %v38, %v149
    %v151 = vlaneseq
    %v152 = vshrl.u32 %v151, 7
    %v153 = vsub.s32 3, %v152
    %v154 = vrot.slane %v38, %v153
    %v155 = vlaneseq
    %v156 = vshrl.u32 %v155, 7
    %v157 = vsub.s32 5, %v156
    %v158 = vrot.slane %v38, %v157
    %v162 = vlaneseq
    %v163 = vshrl.u32 %v162, 7
    %v164 = vsub.s32 1, %v163
    %v165 = vrot.slane %v150, %v164
    %v166 = vlaneseq
    %v167 = vshrl.u32 %v166, 7
    %v168 = vsub.s32 1, %v167
    %v169 = vrot.slane %v154, %v168
    %v170 = vlaneseq
    %v171 = vshrl.u32 %v170, 7
    %v172 = vsub.s32 1, %v171
    %v173 = vrot.slane %v158, %v172
    %v174 = vmul.f32 %v133, %v165
    %v175 = vmul.f32 %v133, %v169
    %v176 = vmul.f32 %v133, %v173
    %v177 = vmul.f32 %v137, %v165
    %v178 = vmul.f32 %v137, %v169
    %v179 = vmul.f32 %v137, %v173
    %v180 = vmul.f32 %v141, %v165
    %v181 = vmul.f32 %v141, %v169
    %v182 = vmul.f32 %v141, %v173
    %v183 = vmul.f32 %v145, %v165
    %v184 = vmul.f32 %v145, %v169
    %v185 = vmul.f32 %v145, %v173
    %v186 = vadd.f32 %v119, %v174
    %v187 = vadd.f32 %v120, %v175
    %v188 = vadd.f32 %v121, %v176
    %v189 = vadd.f32 %v122, %v177
    %v190 = vadd.f32 %v123, %v178
    %v191 = vadd.f32 %v124, %v179
    %v192 = vadd.f32 %v125, %v180
    %v193 = vadd.f32 %v126, %v181
    %v194 = vadd.f32 %v127, %v182
    %v195 = vadd.f32 %v128, %v183
    %v196 = vadd.f32 %v129, %v184
    %v197 = vadd.f32 %v130, %v185
    %v198 = vtanh.pop %v186
    %v199 = vtanh.pop %v187
    %v200 = vtanh.pop %v188
    %v201 = vtanh.pop %v189
    %v202 = vtanh.pop %v190
    %v203 = vtanh.pop %v191
    %v204 = vtanh.pop %v192
    %v205 = vtanh.pop %v193
    %v206 = vtanh.pop %v194
    %v207 = vtanh.pop %v195
    %v208 = vtanh.pop %v196
    %v209 = vtanh.pop %v197
    %v210 = vld [vmem:[#allocation5 + $0x20] sm:$0xff]
    %v211 = vld [vmem:[#allocation5 + $0x28] sm:$0xff]
    %v212 = vld [vmem:[#allocation5 + $0x30] sm:$0xff]
    %v213 = vld [vmem:[#allocation5 + $0x38] sm:$0xff]
    %215 = vset.pattern.permute.xlu0 32
    %216 = vperm.xlu0 %215, %v210
    %v217 = vpop.permute.xlu0 %216
    %220 = vset.pattern.permute.xlu0 32
    %221 = vperm.xlu0 %220, %v211
    %v222 = vpop.permute.xlu0 %221
    %225 = vset.pattern.permute.xlu0 32
    %226 = vperm.xlu0 %225, %v212
    %v227 = vpop.permute.xlu0 %226
    %230 = vset.pattern.permute.xlu0 32
    %231 = vperm.xlu0 %230, %v213
    %v232 = vpop.permute.xlu0 %231
    %vm234 = vcmask 261120
    %v235 = vsel %vm234, %v210, 0
    %v237 = vsel %vm234, %v211, 0
    %v239 = vsel %vm234, %v212, 0
    %v241 = vsel %vm234, %v213, 0
    %243 = vmatprep.subr.mxu0 0.0
    %244 = vmatpush1.msra.mxu0 0.0
    %245 = vmatprep.subr.mxu0 0.0
    %246 = vmatpush1.msra.mxu0 0.0
    %247 = vmatprep.subr.mxu0 0.0
    %248 = vmatpush1.msra.mxu0 0.0
    %249 = vmatprep.subr.mxu0 0.0
    %250 = vmatpush1.msra.mxu0 0.0
    %251 = vmatprep.subr.mxu0 0.0
    %252 = vmatpush1.msra.mxu0 0.0
    %253 = vmatprep.subr.mxu0 0.0
    %254 = vmatpush1.msra.mxu0 0.0
    %255 = vmatprep.subr.mxu0 0.0
    %256 = vmatpush1.msra.mxu0 0.0
    %257 = vmatprep.subr.mxu0 0.0
    %258 = vmatpush1.msra.mxu0 0.0
    %259 = vmatprep.subr.mxu0 0.0
    %260 = vmatpush1.msra.mxu0 0.0
    %261 = vmatprep.subr.mxu0 0.0
    %262 = vmatpush1.msra.mxu0 0.0
    %263 = vmatprep.subr.mxu0 0.0
    %264 = vmatpush1.msra.mxu0 0.0
    %265 = vmatprep.subr.mxu0 0.0
    %266 = vmatpush1.msra.mxu0 0.0
    %267 = vmatprep.subr.mxu0 %v208
    %268 = vmatpush1.msra.mxu0 %v207
    %269 = vmatprep.subr.mxu0 %v205
    %270 = vmatpush1.msra.mxu0 %v204
    %271 = vmatprep.subr.mxu0 %v202
    %272 = vmatpush1.msra.mxu0 %v201
    %273 = vmatprep.subr.mxu0 %v199
    %274 = vmatpush1.msra.mxu0 %v198
    %275 = vmatprep.subr.mxu0 0.0
    %276 = vmatpush2.msra.mxu0 0.0
    %277 = vmatprep.subr.mxu0 0.0
    %278 = vmatpush2.msra.mxu0 0.0
    %279 = vmatprep.subr.mxu0 0.0
    %280 = vmatpush2.msra.mxu0 0.0
    %281 = vmatprep.subr.mxu0 0.0
    %282 = vmatpush2.msra.mxu0 0.0
    %283 = vmatprep.subr.mxu0 0.0
    %284 = vmatpush2.msra.mxu0 0.0
    %285 = vmatprep.subr.mxu0 0.0
    %286 = vmatpush2.msra.mxu0 0.0
    %287 = vmatprep.subr.mxu0 0.0
    %288 = vmatpush2.msra.mxu0 0.0
    %289 = vmatprep.subr.mxu0 0.0
    %290 = vmatpush2.msra.mxu0 0.0
    %291 = vmatprep.subr.mxu0 0.0
    %292 = vmatpush2.msra.mxu0 0.0
    %293 = vmatprep.subr.mxu0 0.0
    %294 = vmatpush2.msra.mxu0 0.0
    %295 = vmatprep.subr.mxu0 0.0
    %296 = vmatpush2.msra.mxu0 0.0
    %297 = vmatprep.subr.mxu0 0.0
    %298 = vmatpush2.msra.mxu0 0.0
    %299 = vmatprep.subr.mxu0 0.0
    %300 = vmatpush2.msra.mxu0 0.0
    %301 = vmatprep.subr.mxu0 0.0
    %302 = vmatpush2.msra.mxu0 0.0
    %303 = vmatprep.subr.mxu0 0.0
    %304 = vmatpush2.msra.mxu0 0.0
    %305 = vmatprep.subr.mxu0 0.0
    %306 = vmatpush2.msra.mxu0 0.0
    %307 = vmatprep.mubr.f32.mxu0 0.0
    %308 = vmatmul.mubr.f32.gmra.mxu0 %v235
    %v309 = vpop.f32.mrf.mxu0
    %v310 = vadd.f32 %v217, %v309
    %v311 = vpop.f32.mrf.mxu0
    %v312 = vadd.f32 %v217, %v311
    %313 = vmatprep.mubr.f32.mxu0 0.0
    %314 = vmatmul.mubr.f32.gmra.mxu0 %v237
    %v315 = vpop.f32.mrf.mxu0
    %v316 = vadd.f32 %v222, %v315
    %v317 = vpop.f32.mrf.mxu0
    %v318 = vadd.f32 %v222, %v317
    %319 = vmatprep.mubr.f32.mxu0 0.0
    %320 = vmatmul.mubr.f32.gmra.mxu0 %v239
    %v321 = vpop.f32.mrf.mxu0
    %v322 = vadd.f32 %v227, %v321
    %v323 = vpop.f32.mrf.mxu0
    %v324 = vadd.f32 %v227, %v323
    %325 = vmatprep.mubr.f32.mxu0 0.0
    %326 = vmatmul.mubr.f32.gmra.mxu0 %v241
    %v327 = vpop.f32.mrf.mxu0
    %v328 = vadd.f32 %v232, %v327
    %v329 = vpop.f32.mrf.mxu0
    %v330 = vadd.f32 %v232, %v329
    %331 = vdwg.mxu0
    %332 = vmatprep.subr.mxu0 0.0
    %333 = vmatpush1.msra.mxu0 0.0
    %334 = vmatprep.subr.mxu0 0.0
    %335 = vmatpush1.msra.mxu0 0.0
    %336 = vmatprep.subr.mxu0 0.0
    %337 = vmatpush1.msra.mxu0 0.0
    %338 = vmatprep.subr.mxu0 0.0
    %339 = vmatpush1.msra.mxu0 0.0
    %340 = vmatprep.subr.mxu0 0.0
    %341 = vmatpush1.msra.mxu0 0.0
    %342 = vmatprep.subr.mxu0 0.0
    %343 = vmatpush1.msra.mxu0 0.0
    %344 = vmatprep.subr.mxu0 0.0
    %345 = vmatpush1.msra.mxu0 0.0
    %346 = vmatprep.subr.mxu0 0.0
    %347 = vmatpush1.msra.mxu0 0.0
    %348 = vmatprep.subr.mxu0 0.0
    %349 = vmatpush1.msra.mxu0 0.0
    %350 = vmatprep.subr.mxu0 0.0
    %351 = vmatpush1.msra.mxu0 0.0
    %352 = vmatprep.subr.mxu0 0.0
    %353 = vmatpush1.msra.mxu0 0.0
    %354 = vmatprep.subr.mxu0 0.0
    %355 = vmatpush1.msra.mxu0 0.0
    %356 = vmatprep.subr.mxu0 0.0
    %357 = vmatpush1.msra.mxu0 %v209
    %358 = vmatprep.subr.mxu0 0.0
    %359 = vmatpush1.msra.mxu0 %v206
    %360 = vmatprep.subr.mxu0 0.0
    %361 = vmatpush1.msra.mxu0 %v203
    %362 = vmatprep.subr.mxu0 0.0
    %363 = vmatpush1.msra.mxu0 %v200
    %364 = vmatprep.subr.mxu0 0.0
    %365 = vmatpush2.msra.mxu0 0.0
    %366 = vmatprep.subr.mxu0 0.0
    %367 = vmatpush2.msra.mxu0 0.0
    %368 = vmatprep.subr.mxu0 0.0
    %369 = vmatpush2.msra.mxu0 0.0
    %370 = vmatprep.subr.mxu0 0.0
    %371 = vmatpush2.msra.mxu0 0.0
    %372 = vmatprep.subr.mxu0 0.0
    %373 = vmatpush2.msra.mxu0 0.0
    %374 = vmatprep.subr.mxu0 0.0
    %375 = vmatpush2.msra.mxu0 0.0
    %376 = vmatprep.subr.mxu0 0.0
    %377 = vmatpush2.msra.mxu0 0.0
    %378 = vmatprep.subr.mxu0 0.0
    %379 = vmatpush2.msra.mxu0 0.0
    %380 = vmatprep.subr.mxu0 0.0
    %381 = vmatpush2.msra.mxu0 0.0
    %382 = vmatprep.subr.mxu0 0.0
    %383 = vmatpush2.msra.mxu0 0.0
    %384 = vmatprep.subr.mxu0 0.0
    %385 = vmatpush2.msra.mxu0 0.0
    %386 = vmatprep.subr.mxu0 0.0
    %387 = vmatpush2.msra.mxu0 0.0
    %388 = vmatprep.subr.mxu0 0.0
    %389 = vmatpush2.msra.mxu0 0.0
    %390 = vmatprep.subr.mxu0 0.0
    %391 = vmatpush2.msra.mxu0 0.0
    %392 = vmatprep.subr.mxu0 0.0
    %393 = vmatpush2.msra.mxu0 0.0
    %394 = vmatprep.subr.mxu0 0.0
    %395 = vmatpush2.msra.mxu0 0.0
    %396 = vmatprep.mubr.f32.mxu0 0.0
    %397 = vmatmul.mubr.f32.gmra.mxu0 %v235
    %v398 = vpop.f32.mrf.mxu0
    %v399 = vadd.f32 %v217, %v398
    %v400 = vpop.f32.mrf.mxu0
    %401 = vmatprep.mubr.f32.mxu0 0.0
    %402 = vmatmul.mubr.f32.gmra.mxu0 %v237
    %v403 = vpop.f32.mrf.mxu0
    %v404 = vadd.f32 %v222, %v403
    %v405 = vpop.f32.mrf.mxu0
    %406 = vmatprep.mubr.f32.mxu0 0.0
    %407 = vmatmul.mubr.f32.gmra.mxu0 %v239
    %v408 = vpop.f32.mrf.mxu0
    %v409 = vadd.f32 %v227, %v408
    %v410 = vpop.f32.mrf.mxu0
    %411 = vmatprep.mubr.f32.mxu0 0.0
    %412 = vmatmul.mubr.f32.gmra.mxu0 %v241
    %v413 = vpop.f32.mrf.mxu0
    %v414 = vadd.f32 %v232, %v413
    %v415 = vpop.f32.mrf.mxu0
    %416 = vdwg.mxu0
    %v417 = vtanh.pop %v310
    %v418 = vtanh.pop %v312
    %v419 = vtanh.pop %v399
    %v420 = vtanh.pop %v316
    %v421 = vtanh.pop %v318
    %v422 = vtanh.pop %v404
    %v423 = vtanh.pop %v322
    %v424 = vtanh.pop %v324
    %v425 = vtanh.pop %v409
    %v426 = vtanh.pop %v328
    %v427 = vtanh.pop %v330
    %v428 = vtanh.pop %v414
    %v429 = vld [vmem:[#allocation5 + $0x40] sm:$0xff]
    %v430 = vld [vmem:[#allocation5 + $0x48] sm:$0xff]
    %v431 = vld [vmem:[#allocation5 + $0x50] sm:$0xff]
    %v432 = vld [vmem:[#allocation5 + $0x58] sm:$0xff]
    %434 = vset.pattern.permute.xlu0 32
    %435 = vperm.xlu0 %434, %v429
    %v436 = vpop.permute.xlu0 %435
    %439 = vset.pattern.permute.xlu0 32
    %440 = vperm.xlu0 %439, %v430
    %v441 = vpop.permute.xlu0 %440
    %444 = vset.pattern.permute.xlu0 32
    %445 = vperm.xlu0 %444, %v431
    %v446 = vpop.permute.xlu0 %445
    %449 = vset.pattern.permute.xlu0 32
    %450 = vperm.xlu0 %449, %v432
    %v451 = vpop.permute.xlu0 %450
    %v453 = vsel %vm234, %v429, 0
    %v455 = vsel %vm234, %v430, 0
    %v457 = vsel %vm234, %v431, 0
    %v459 = vsel %vm234, %v432, 0
    %461 = vmatprep.subr.mxu0 0.0
    %462 = vmatpush1.msra.mxu0 0.0
    %463 = vmatprep.subr.mxu0 0.0
    %464 = vmatpush1.msra.mxu0 0.0
    %465 = vmatprep.subr.mxu0 0.0
    %466 = vmatpush1.msra.mxu0 0.0
    %467 = vmatprep.subr.mxu0 0.0
    %468 = vmatpush1.msra.mxu0 0.0
    %469 = vmatprep.subr.mxu0 0.0
    %470 = vmatpush1.msra.mxu0 0.0
    %471 = vmatprep.subr.mxu0 0.0
    %472 = vmatpush1.msra.mxu0 0.0
    %473 = vmatprep.subr.mxu0 0.0
    %474 = vmatpush1.msra.mxu0 0.0
    %475 = vmatprep.subr.mxu0 0.0
    %476 = vmatpush1.msra.mxu0 0.0
    %477 = vmatprep.subr.mxu0 0.0
    %478 = vmatpush1.msra.mxu0 0.0
    %479 = vmatprep.subr.mxu0 0.0
    %480 = vmatpush1.msra.mxu0 0.0
    %481 = vmatprep.subr.mxu0 0.0
    %482 = vmatpush1.msra.mxu0 0.0
    %483 = vmatprep.subr.mxu0 0.0
    %484 = vmatpush1.msra.mxu0 0.0
    %485 = vmatprep.subr.mxu0 %v427
    %486 = vmatpush1.msra.mxu0 %v426
    %487 = vmatprep.subr.mxu0 %v424
    %488 = vmatpush1.msra.mxu0 %v423
    %489 = vmatprep.subr.mxu0 %v421
    %490 = vmatpush1.msra.mxu0 %v420
    %491 = vmatprep.subr.mxu0 %v418
    %492 = vmatpush1.msra.mxu0 %v417
    %493 = vmatprep.subr.mxu0 0.0
    %494 = vmatpush2.msra.mxu0 0.0
    %495 = vmatprep.subr.mxu0 0.0
    %496 = vmatpush2.msra.mxu0 0.0
    %497 = vmatprep.subr.mxu0 0.0
    %498 = vmatpush2.msra.mxu0 0.0
    %499 = vmatprep.subr.mxu0 0.0
    %500 = vmatpush2.msra.mxu0 0.0
    %501 = vmatprep.subr.mxu0 0.0
    %502 = vmatpush2.msra.mxu0 0.0
    %503 = vmatprep.subr.mxu0 0.0
    %504 = vmatpush2.msra.mxu0 0.0
    %505 = vmatprep.subr.mxu0 0.0
    %506 = vmatpush2.msra.mxu0 0.0
    %507 = vmatprep.subr.mxu0 0.0
    %508 = vmatpush2.msra.mxu0 0.0
    %509 = vmatprep.subr.mxu0 0.0
    %510 = vmatpush2.msra.mxu0 0.0
    %511 = vmatprep.subr.mxu0 0.0
    %512 = vmatpush2.msra.mxu0 0.0
    %513 = vmatprep.subr.mxu0 0.0
    %514 = vmatpush2.msra.mxu0 0.0
    %515 = vmatprep.subr.mxu0 0.0
    %516 = vmatpush2.msra.mxu0 0.0
    %517 = vmatprep.subr.mxu0 0.0
    %518 = vmatpush2.msra.mxu0 0.0
    %519 = vmatprep.subr.mxu0 0.0
    %520 = vmatpush2.msra.mxu0 0.0
    %521 = vmatprep.subr.mxu0 0.0
    %522 = vmatpush2.msra.mxu0 0.0
    %523 = vmatprep.subr.mxu0 0.0
    %524 = vmatpush2.msra.mxu0 0.0
    %525 = vmatprep.mubr.f32.mxu0 0.0
    %526 = vmatmul.mubr.f32.gmra.mxu0 %v453
    %v527 = vpop.f32.mrf.mxu0
    %v528 = vadd.f32 %v436, %v527
    %v529 = vpop.f32.mrf.mxu0
    %v530 = vadd.f32 %v436, %v529
    %531 = vmatprep.mubr.f32.mxu0 0.0
    %532 = vmatmul.mubr.f32.gmra.mxu0 %v455
    %v533 = vpop.f32.mrf.mxu0
    %v534 = vadd.f32 %v441, %v533
    %v535 = vpop.f32.mrf.mxu0
    %v536 = vadd.f32 %v441, %v535
    %537 = vmatprep.mubr.f32.mxu0 0.0
    %538 = vmatmul.mubr.f32.gmra.mxu0 %v457
    %v539 = vpop.f32.mrf.mxu0
    %v540 = vadd.f32 %v446, %v539
    %v541 = vpop.f32.mrf.mxu0
    %v542 = vadd.f32 %v446, %v541
    %543 = vmatprep.mubr.f32.mxu0 0.0
    %544 = vmatmul.mubr.f32.gmra.mxu0 %v459
    %v545 = vpop.f32.mrf.mxu0
    %v546 = vadd.f32 %v451, %v545
    %v547 = vpop.f32.mrf.mxu0
    %v548 = vadd.f32 %v451, %v547
    %549 = vdwg.mxu0
    %550 = vmatprep.subr.mxu0 0.0
    %551 = vmatpush1.msra.mxu0 0.0
    %552 = vmatprep.subr.mxu0 0.0
    %553 = vmatpush1.msra.mxu0 0.0
    %554 = vmatprep.subr.mxu0 0.0
    %555 = vmatpush1.msra.mxu0 0.0
    %556 = vmatprep.subr.mxu0 0.0
    %557 = vmatpush1.msra.mxu0 0.0
    %558 = vmatprep.subr.mxu0 0.0
    %559 = vmatpush1.msra.mxu0 0.0
    %560 = vmatprep.subr.mxu0 0.0
    %561 = vmatpush1.msra.mxu0 0.0
    %562 = vmatprep.subr.mxu0 0.0
    %563 = vmatpush1.msra.mxu0 0.0
    %564 = vmatprep.subr.mxu0 0.0
    %565 = vmatpush1.msra.mxu0 0.0
    %566 = vmatprep.subr.mxu0 0.0
    %567 = vmatpush1.msra.mxu0 0.0
    %568 = vmatprep.subr.mxu0 0.0
    %569 = vmatpush1.msra.mxu0 0.0
    %570 = vmatprep.subr.mxu0 0.0
    %571 = vmatpush1.msra.mxu0 0.0
    %572 = vmatprep.subr.mxu0 0.0
    %573 = vmatpush1.msra.mxu0 0.0
    %574 = vmatprep.subr.mxu0 0.0
    %575 = vmatpush1.msra.mxu0 %v428
    %576 = vmatprep.subr.mxu0 0.0
    %577 = vmatpush1.msra.mxu0 %v425
    %578 = vmatprep.subr.mxu0 0.0
    %579 = vmatpush1.msra.mxu0 %v422
    %580 = vmatprep.subr.mxu0 0.0
    %581 = vmatpush1.msra.mxu0 %v419
    %582 = vmatprep.subr.mxu0 0.0
    %583 = vmatpush2.msra.mxu0 0.0
    %584 = vmatprep.subr.mxu0 0.0
    %585 = vmatpush2.msra.mxu0 0.0
    %586 = vmatprep.subr.mxu0 0.0
    %587 = vmatpush2.msra.mxu0 0.0
    %588 = vmatprep.subr.mxu0 0.0
    %589 = vmatpush2.msra.mxu0 0.0
    %590 = vmatprep.subr.mxu0 0.0
    %591 = vmatpush2.msra.mxu0 0.0
    %592 = vmatprep.subr.mxu0 0.0
    %593 = vmatpush2.msra.mxu0 0.0
    %594 = vmatprep.subr.mxu0 0.0
    %595 = vmatpush2.msra.mxu0 0.0
    %596 = vmatprep.subr.mxu0 0.0
    %597 = vmatpush2.msra.mxu0 0.0
    %598 = vmatprep.subr.mxu0 0.0
    %599 = vmatpush2.msra.mxu0 0.0
    %600 = vmatprep.subr.mxu0 0.0
    %601 = vmatpush2.msra.mxu0 0.0
    %602 = vmatprep.subr.mxu0 0.0
    %603 = vmatpush2.msra.mxu0 0.0
    %604 = vmatprep.subr.mxu0 0.0
    %605 = vmatpush2.msra.mxu0 0.0
    %606 = vmatprep.subr.mxu0 0.0
    %607 = vmatpush2.msra.mxu0 0.0
    %608 = vmatprep.subr.mxu0 0.0
    %609 = vmatpush2.msra.mxu0 0.0
    %610 = vmatprep.subr.mxu0 0.0
    %611 = vmatpush2.msra.mxu0 0.0
    %612 = vmatprep.subr.mxu0 0.0
    %613 = vmatpush2.msra.mxu0 0.0
    %614 = vmatprep.mubr.f32.mxu0 0.0
    %615 = vmatmul.mubr.f32.gmra.mxu0 %v453
    %v616 = vpop.f32.mrf.mxu0
    %v617 = vadd.f32 %v436, %v616
    %v618 = vpop.f32.mrf.mxu0
    %619 = vmatprep.mubr.f32.mxu0 0.0
    %620 = vmatmul.mubr.f32.gmra.mxu0 %v455
    %v621 = vpop.f32.mrf.mxu0
    %v622 = vadd.f32 %v441, %v621
    %v623 = vpop.f32.mrf.mxu0
    %624 = vmatprep.mubr.f32.mxu0 0.0
    %625 = vmatmul.mubr.f32.gmra.mxu0 %v457
    %v626 = vpop.f32.mrf.mxu0
    %v627 = vadd.f32 %v446, %v626
    %v628 = vpop.f32.mrf.mxu0
    %629 = vmatprep.mubr.f32.mxu0 0.0
    %630 = vmatmul.mubr.f32.gmra.mxu0 %v459
    %v631 = vpop.f32.mrf.mxu0
    %v632 = vadd.f32 %v451, %v631
    %v633 = vpop.f32.mrf.mxu0
    %634 = vdwg.mxu0
    %v635 = vtanh.pop %v528
    %v636 = vtanh.pop %v530
    %v637 = vtanh.pop %v617
    %v638 = vtanh.pop %v534
    %v639 = vtanh.pop %v536
    %v640 = vtanh.pop %v622
    %v641 = vtanh.pop %v540
    %v642 = vtanh.pop %v542
    %v643 = vtanh.pop %v627
    %v644 = vtanh.pop %v546
    %v645 = vtanh.pop %v548
    %v646 = vtanh.pop %v632
    %v647 = vld [vmem:[#allocation5 + $0x60] sm:$0xff]
    %v648 = vld [vmem:[#allocation5 + $0x68] sm:$0xff]
    %v649 = vld [vmem:[#allocation5 + $0x70] sm:$0xff]
    %v650 = vld [vmem:[#allocation5 + $0x78] sm:$0xff]
    %v651 = vld [vmem:[#allocation5 + $0x60] sm:$0x1]
    %653 = vset.pattern.permute.xlu0 0
    %654 = vperm.xlu0 %653, %v647
    %v655 = vpop.permute.xlu0 %654
    %658 = vset.pattern.permute.xlu0 0
    %659 = vperm.xlu0 %658, %v648
    %v660 = vpop.permute.xlu0 %659
    %663 = vset.pattern.permute.xlu0 0
    %664 = vperm.xlu0 %663, %v649
    %v665 = vpop.permute.xlu0 %664
    %668 = vset.pattern.permute.xlu0 0
    %669 = vperm.xlu0 %668, %v650
    %v670 = vpop.permute.xlu0 %669
    %v672 = vmul.f32 %v655, %v635
    %v673 = vmul.f32 %v655, %v636
    %v674 = vmul.f32 %v655, %v637
    %v675 = vmul.f32 %v660, %v638
    %v676 = vmul.f32 %v660, %v639
    %v677 = vmul.f32 %v660, %v640
    %v678 = vmul.f32 %v665, %v641
    %v679 = vmul.f32 %v665, %v642
    %v680 = vmul.f32 %v665, %v643
    %v681 = vmul.f32 %v670, %v644
    %v682 = vmul.f32 %v670, %v645
    %v683 = vmul.f32 %v670, %v646
    %v684 = vadd.f32 %v672, %v675
    %v685 = vadd.f32 %v684, %v678
    %v686 = vadd.f32 %v685, %v681
    %v687 = vrot.slane %v686, 4
    %v688 = vadd.f32 %v686, %v687
    %v689 = vrot.slane %v688, 2
    %v690 = vadd.f32 %v688, %v689
    %v691 = vrot.slane %v690, 1
    %v692 = vadd.f32 %v690, %v691
    %v693 = vadd.f32 %v673, %v676
    %v694 = vadd.f32 %v693, %v679
    %v695 = vadd.f32 %v694, %v682
    %v696 = vrot.slane %v695, 4
    %v697 = vadd.f32 %v695, %v696
    %v698 = vrot.slane %v697, 2
    %v699 = vadd.f32 %v697, %v698
    %v700 = vrot.slane %v699, 1
    %v701 = vadd.f32 %v699, %v700
    %v702 = vadd.f32 %v674, %v677
    %v703 = vadd.f32 %v702, %v680
    %v704 = vadd.f32 %v703, %v683
    %v705 = vrot.slane %v704, 4
    %v706 = vadd.f32 %v704, %v705
    %v707 = vrot.slane %v706, 2
    %v708 = vadd.f32 %v706, %v707
    %v709 = vrot.slane %v708, 1
    %v710 = vadd.f32 %v708, %v709
    %712 = vset.pattern.permute.xlu0 1
    %713 = vperm.xlu0 %712, %v651
    %v714 = vpop.permute.xlu0 %713
    %v716 = vadd.f32 %v692, %v714
    %v717 = vadd.f32 %v701, %v714
    %v718 = vadd.f32 %v710, %v714
    %v722 = vcombine.low %v716, %v717
    %v724 = vunpack.c.l.s4 1966171168
    %v725 = vunpack.c.0.s8 %v724
    %v726 = vlaneseq
    %v727 = vshrl.u32 %v726, 7
    %v728 = vsub.s32 %v725, %v727
    %v729 = vrot.slane %v722, %v728
    %v731 = vunpack.c.l.s4 1966171168
    %v732 = vunpack.c.0.s8 %v731
    %v733 = vlaneseq
    %v734 = vshrl.u32 %v733, 7
    %v735 = vsub.s32 %v732, %v734
    %v736 = vrot.slane %v718, %v735
    %v737 = vcombine.low %v729, %v736
    %v739 = vunpack.c.l.s4 1966171168
    %v740 = vunpack.c.0.s8 %v739
    %v741 = vlaneseq
    %v742 = vshrl.u32 %v741, 7
    %v743 = vsub.s32 %v740, %v742
    %v744 = vrot.slane %v737, %v743
    %v746 = vlaneseq
    %vm747 = vcmp.ge.s32.totalorder %v746, 0
    %vm748 = vcmp.lt.s32.totalorder %v746, 384
    %vm749 = vmand %vm747, %vm748
    %750 = vst.msk [vmem:[#allocation7] sm:$0x7] %vm749, %v744
    // Predicated region
    $region18: #{tpu_custom_call.1} parent=1 // pred_check
      _
    $region19: #{tpu_custom_call.1} parent=1 // pred_check_branch
      %752 = sbr.rel (0) target = $region21
    $region20: #{tpu_custom_call.1} parent=1 // pred_region
      %s754 = ssub.s32 48, 48
      %755 = vsyncadd [#allocation4], %s754
      %s757 = sshll.u32 [#allocation7], 4
      %s758 = int_to_ptr.vmem [resolvable:$true] %s757
      %760 = dma.vmem_to_hbm [thread:$0]  %s758, 48, %s2, [#allocation4]
    $region21: #{tpu_custom_call.1} parent=1 // pred_fallthru
      _
    // Predicated region
    $region22: #{tpu_custom_call.1} parent=1 // pred_check
      _
    $region23: #{tpu_custom_call.1} parent=1 // pred_check_branch
      %762 = sbr.rel (0) target = $region25
    $region24: #{tpu_custom_call.1} parent=1 // pred_region
      %763 = dma.done [#allocation4], 48
    $region25: #{tpu_custom_call.1} parent=1 // pred_fallthru
      _
    %764 = vsyncpa [#allocation3], 1
    %765 = vsyncpa [#allocation6], 1
    %766 = vsyncpa [#allocation4], 1

</llo_original>
